<compile_context>
chip_gen: v7x
topology: tpu7x:2x2x1
jax: 0.10.0
libtpu: 0.0.40
codegen_flags: <defaults>
</compile_context>

<pallas_src>
import jax
import jax.numpy as jnp
from jax.experimental import pallas as pl
from jax.experimental.pallas import tpu as pltpu


def _round_up(x, m):
    return (x + m - 1) // m * m


def highway_kernel(x_ref, w_ref, b_ref, o_ref):
    """One (TM, E) row-tile of the highway forward pass.

    x_ref : (TM, E)   input rows (input dtype)
    w_ref : (E, 2E)   fused [Wg | Wp] weights (compute dtype, e.g. bf16), resident
    b_ref : (1, 2E)   fused [bg | bp] biases (f32), resident
    o_ref : (TM, E)   output rows
    """
    x = x_ref[...]
    e = o_ref.shape[-1]

    # Single fused MXU matmul for both branches; f32 accumulation.
    lin = jnp.dot(x.astype(w_ref.dtype), w_ref[...],
                  preferred_element_type=jnp.float32) + b_ref[...]

    gate = jax.nn.sigmoid(lin[:, :e])      # EUP transcendental
    proj = jnp.maximum(lin[:, e:], 0.0)    # VPU

    xf = x.astype(jnp.float32)
    # gate*proj + (1-gate)*x  ==  gate*(proj - x) + x  (one fewer mul / temp)
    out = gate * (proj - xf) + xf

    # TODO(synk): training-mode dropout (pltpu.prng_*) not implemented;
    # eval-mode dropout is identity, matching model.eval() semantics.
    o_ref[...] = out.astype(o_ref.dtype)


def _vmem_limit_bytes(tm, e_pad, in_dtype, compute_dtype):
    in_b = jnp.dtype(in_dtype).itemsize
    cd_b = jnp.dtype(compute_dtype).itemsize
    need = (2 * 2 * tm * e_pad * in_b          # x + out tiles, double-buffered
            + e_pad * 2 * e_pad * cd_b         # resident fused weight
            + 2 * e_pad * 4                    # resident fused bias
            + 6 * tm * e_pad * 4)              # in-kernel f32 temporaries
    return int(min(max(2 * need, 16 * 1024 * 1024), 64 * 1024 * 1024))


def highway_forward(x, wg, bg, wp, bp, *, block_rows=512,
                    compute_dtype=jnp.bfloat16):
    """Highway forward.

    x : (B, E). wg/wp: (E, E) stored pre-transposed as (in, out).
    bg/bp: (E,) or (1, E). Returns (B, E) in x.dtype.
    """
    B, E = x.shape
    bg = jnp.reshape(bg, (1, E)).astype(jnp.float32)
    bp = jnp.reshape(bp, (1, E)).astype(jnp.float32)

    # --- lane-dense layout: pad feature dim to a multiple of 128 lanes ---
    E_pad = _round_up(E, 128)
    if E_pad != E:
        pe = E_pad - E
        x_p = jnp.pad(x, ((0, 0), (0, pe)))
        wg = jnp.pad(wg, ((0, pe), (0, pe)))
        wp = jnp.pad(wp, ((0, pe), (0, pe)))
        bg = jnp.pad(bg, ((0, 0), (0, pe)))
        bp = jnp.pad(bp, ((0, 0), (0, pe)))
    else:
        x_p = x

    # --- fuse the two linears into one (E, 2E) matmul; weights in compute dtype ---
    w_fused = jnp.concatenate([wg, wp], axis=1).astype(compute_dtype)
    b_fused = jnp.concatenate([bg, bp], axis=1)  # f32

    # --- batch grid: (TM, E_pad) row tiles, weights resident across steps ---
    if B <= block_rows:
        TM = _round_up(B, 8)
    else:
        TM = _round_up(block_rows, 8)
    B_pad = _round_up(B, TM)
    if B_pad != B:
        x_p = jnp.pad(x_p, ((0, B_pad - B), (0, 0)))

    grid = (B_pad // TM,)

    itemsize = jnp.dtype(x.dtype).itemsize
    flops = 2 * B_pad * E_pad * (2 * E_pad)
    bytes_accessed = (B_pad * E_pad * itemsize            # x
                      + E_pad * 2 * E_pad * jnp.dtype(compute_dtype).itemsize
                      + 2 * E_pad * 4                     # bias
                      + B_pad * E_pad * itemsize)         # out

    out_p = pl.pallas_call(
        highway_kernel,
        out_shape=jax.ShapeDtypeStruct((B_pad, E_pad), x.dtype),
        grid_spec=pltpu.PrefetchScalarGridSpec(
            num_scalar_prefetch=0,
            grid=grid,
            in_specs=[
                pl.BlockSpec((TM, E_pad), lambda i: (i, 0)),         # x row tile
                pl.BlockSpec((E_pad, 2 * E_pad), lambda i: (0, 0)),  # fused W, resident
                pl.BlockSpec((1, 2 * E_pad), lambda i: (0, 0)),      # fused bias, resident
            ],
            out_specs=pl.BlockSpec((TM, E_pad), lambda i: (i, 0)),
        ),
        compiler_params=pltpu.CompilerParams(
            # row-tile loop is embarrassingly parallel -> sharded across v7x's 2 TCs
            dimension_semantics=("parallel",),
            vmem_limit_bytes=_vmem_limit_bytes(TM, E_pad, x.dtype, compute_dtype),
        ),
        cost_estimate=pl.CostEstimate(
            flops=flops,
            transcendentals=B_pad * E_pad,     # sigmoid
            bytes_accessed=bytes_accessed,
        ),
    )(x_p, w_fused, b_fused)

    return out_p[:B, :E]


def highway_ref(x, wg, bg, wp, bp):
    """Pure-JAX f32 reference for correctness checking."""
    gate = jax.nn.sigmoid(x @ wg + bg)
    proj = jax.nn.relu(x @ wp + bp)
    return gate * proj + (1.0 - gate) * x


if __name__ == "__main__":
    batch = 8
    embed_size = 64      # deliberately not lane-aligned; wrapper pads to 128
    dropout_rate = 0.3   # unused at inference (identity)

    key = jax.random.PRNGKey(0)
    k_x, k_wg, k_bg, k_wp, k_bp = jax.random.split(key, 5)

    # Deterministic synthetic params (nn.Linear(E, E) weights stored (in, out)).
    x = jax.random.normal(k_x, (batch, embed_size), dtype=jnp.float32)
    wg = jax.random.normal(k_wg, (embed_size, embed_size), dtype=jnp.float32) * 0.1
    bg = jax.random.normal(k_bg, (1, embed_size), dtype=jnp.float32) * 0.1
    wp = jax.random.normal(k_wp, (embed_size, embed_size), dtype=jnp.float32) * 0.1
    bp = jax.random.normal(k_bp, (1, embed_size), dtype=jnp.float32) * 0.1

    expected = highway_ref(x, wg, bg, wp, bp)

    # f32 MXU path: tight check against the pure-JAX reference.
    out_f32 = highway_forward(x, wg, bg, wp, bp, compute_dtype=jnp.float32)
    jax.block_until_ready(out_f32)
    assert out_f32.shape == (batch, embed_size)
    assert jnp.allclose(out_f32, expected, atol=1e-5, rtol=1e-5), "f32 mismatch vs reference"

    # bf16 MXU path (default; peak MXU throughput on v6e/v7x): looser tolerance.
    out_bf16 = highway_forward(x, wg, bg, wp, bp)  # compute_dtype=bf16
    jax.block_until_ready(out_bf16)
    assert out_bf16.shape == (batch, embed_size)
    assert jnp.allclose(out_bf16, expected, atol=5e-2, rtol=5e-2), "bf16 mismatch vs reference"

    print("KERNEL_OK")
</pallas_src>

<mosaic_0001>
module attributes {stable_mosaic.version = 11 : i64} {
  func.func @highway_kernel(%arg0: i32, %arg1: memref<8x128xf32, #tpu.memory_space<vmem>>, %arg2: memref<128x256xf32, #tpu.memory_space<vmem>>, %arg3: memref<1x256xf32, #tpu.memory_space<vmem>>, %arg4: memref<8x128xf32, #tpu.memory_space<vmem>>) attributes {dimension_semantics = [#tpu.dimension_semantics<parallel>], iteration_bounds = array<i64: 1>, scalar_prefetch = 0 : i64, scratch_operands = 0 : i64, tpu.core_type = #tpu.core_type<tc>, window_params = [{transform_indices = @transform_0, window_bounds = array<i64: 8, 128>}, {pipeline_mode = #tpu.pipeline_mode<synchronous>, transform_indices = @transform_1, window_bounds = array<i64: 128, 256>}, {pipeline_mode = #tpu.pipeline_mode<synchronous>, transform_indices = @transform_2, window_bounds = array<i64: 1, 256>}, {transform_indices = @transform_3, window_bounds = array<i64: 8, 128>}]} {
    %c0 = arith.constant 0 : index
    %c0_0 = arith.constant 0 : index
    %0 = vector.load %arg1[%c0, %c0_0] : memref<8x128xf32, #tpu.memory_space<vmem>>, vector<8x128xf32>
    %c0_1 = arith.constant 0 : index
    %c0_2 = arith.constant 0 : index
    %1 = vector.load %arg2[%c0_1, %c0_2] : memref<128x256xf32, #tpu.memory_space<vmem>>, vector<128x256xf32>
    %cst = arith.constant dense<0.000000e+00> : vector<8x256xf32>
    %2 = tpu.matmul %0, %1, %cst {dimension_numbers = #tpu.dot_dimension_numbers<[1], [0], [0], [1], [0, 0, 1, 1], [], []>} : vector<8x128xf32>, vector<128x256xf32>, vector<8x256xf32> -> vector<8x256xf32>
    %c0_3 = arith.constant 0 : index
    %c0_4 = arith.constant 0 : index
    %3 = vector.load %arg3[%c0_3, %c0_4] : memref<1x256xf32, #tpu.memory_space<vmem>>, vector<1x256xf32>
    %4 = vector.broadcast %3 : vector<1x256xf32> to vector<8x256xf32>
    %5 = arith.addf %2, %4 : vector<8x256xf32>
    %6 = vector.extract_strided_slice %5 {offsets = [0, 0], sizes = [8, 128], strides = [1, 1]} : vector<8x256xf32> to vector<8x128xf32>
    %7 = arith.negf %6 : vector<8x128xf32>
    %8 = math.exp %7 : vector<8x128xf32>
    %cst_5 = arith.constant 1.000000e+00 : f32
    %9 = vector.broadcast %cst_5 : f32 to vector<8x128xf32>
    %10 = arith.addf %9, %8 : vector<8x128xf32>
    %11 = arith.divf %9, %10 : vector<8x128xf32>
    %12 = vector.extract_strided_slice %5 {offsets = [0, 128], sizes = [8, 128], strides = [1, 1]} : vector<8x256xf32> to vector<8x128xf32>
    %cst_6 = arith.constant 0.000000e+00 : f32
    %13 = vector.broadcast %cst_6 : f32 to vector<8x128xf32>
    %14 = arith.maximumf %12, %13 : vector<8x128xf32>
    %15 = arith.subf %14, %0 : vector<8x128xf32>
    %16 = arith.mulf %11, %15 : vector<8x128xf32>
    %17 = arith.addf %16, %0 : vector<8x128xf32>
    %c0_7 = arith.constant 0 : index
    %c0_8 = arith.constant 0 : index
    %18 = vector.load %arg4[%c0_7, %c0_8] : memref<8x128xf32, #tpu.memory_space<vmem>>, vector<8x128xf32>
    tpu.vector_store %arg4[%c0_7, %c0_8], %17 {strides = array<i32>} : memref<8x128xf32, #tpu.memory_space<vmem>>, vector<8x128xf32>,
    return
  }
  func.func @transform_0(%arg0: i32) -> (i32, i32) {
    %c0_i32 = arith.constant 0 : i32
    %c0_i32_0 = arith.constant 0 : i32
    return %arg0, %c0_i32 : i32, i32
  }
  func.func @transform_1(%arg0: i32) -> (i32, i32) {
    %c0_i32 = arith.constant 0 : i32
    %c0_i32_0 = arith.constant 0 : i32
    %c0_i32_1 = arith.constant 0 : i32
    return %c0_i32, %c0_i32_0 : i32, i32
  }
  func.func @transform_2(%arg0: i32) -> (i32, i32) {
    %c0_i32 = arith.constant 0 : i32
    %c0_i32_0 = arith.constant 0 : i32
    %c0_i32_1 = arith.constant 0 : i32
    return %c0_i32, %c0_i32_0 : i32, i32
  }
  func.func @transform_3(%arg0: i32) -> (i32, i32) {
    %c0_i32 = arith.constant 0 : i32
    %c0_i32_0 = arith.constant 0 : i32
    return %arg0, %c0_i32 : i32, i32
  }
}

</mosaic_0001>

<llo_original>
// kernel: tpu_custom_call.1
$region0: #{tpu_custom_call.1}
  #allocation0 [shape = 'u32[]', space=smem, size = 0x4, offset = 0x4, fixed_abs, tag = 'smem constant byte address 0x4 - core index']
  #allocation1 [shape = 'u32[144,128]{1,0:T(1,128)}', space=vmem, size = 0x12000, scoped, tag = 'internal scratch']
  %s0 = inlined_call_operand.hbm [shape: f32[8,128], index: 0, kind: input, shape index: {}]
  %s1 = inlined_call_operand.hbm [shape: f32[128,256], index: 1, kind: input, shape index: {}]
  %s2 = inlined_call_operand.vmem [shape: f32[1,256], index: 2, kind: input, shape index: {}]
  %s3 = inlined_call_operand.hbm [shape: f32[8,128], index: 3, kind: output, shape index: {}]
  %s4 = sld [smem:[#allocation0]]
  $region30: #{tpu_custom_call.1} parent=0
    _
  %s6 = ssub.s32 1, %s4
  %s7 = scalar_select 0, %s6, %s4
  $region1: #{tpu_custom_call.1} parent=0
    #allocation2 [shape = 'u8[4096]{0}', space=vmem, size = 0x1000, scoped, tag = 'input window, operand 0, single buffered']
    #allocation3 [shape = 's32[1]{0}', space=sflag, size = 0x4, scoped, tag = 'scoped memory for tpu_custom_call.1']
    #allocation4 [shape = 's32[1]{0}', space=sflag, size = 0x4, scoped, tag = 'scoped memory for tpu_custom_call.1']
    #allocation5 [shape = 'u8[131072]{0}', space=vmem, size = 0x20000, scoped, tag = 'input window, operand 1, single buffered']
    #allocation6 [shape = 's32[1]{0}', space=sflag, size = 0x4, scoped, tag = 'scoped memory for tpu_custom_call.1']
    #allocation7 [shape = 'u8[4096]{0}', space=vmem, size = 0x1000, scoped, tag = 'output window, operand 0, single buffered']
    %8 = vsyncpa [#allocation3], 0
    %9 = vsyncpa [#allocation6], 0
    %10 = vsyncpa [#allocation4], 0
    // Predicated region
    $region2: #{tpu_custom_call.1} parent=1 // pred_check
      _
    $region3: #{tpu_custom_call.1} parent=1 // pred_check_branch
      %12 = sbr.rel (0) target = $region5
    $region4: #{tpu_custom_call.1} parent=1 // pred_region
      %s14 = ssub.s32 128, 128
      %15 = vsyncadd [#allocation3], %s14
      %s17 = sshll.u32 [#allocation2], 4
      %s18 = int_to_ptr.vmem [resolvable:$true] %s17
      %20 = dma.hbm_to_vmem [thread:$0]  %s0, 128, %s18, [#allocation3]
    $region5: #{tpu_custom_call.1} parent=1 // pred_fallthru
      _
    // Predicated region
    $region6: #{tpu_custom_call.1} parent=1 // pred_check
      _
    $region7: #{tpu_custom_call.1} parent=1 // pred_check_branch
      %22 = sbr.rel (0) target = $region9
    $region8: #{tpu_custom_call.1} parent=1 // pred_region
      %s24 = ssub.s32 4096, 4096
      %25 = vsyncadd [#allocation6], %s24
      %s26 = sshll.u32 [#allocation5], 4
      %s27 = int_to_ptr.vmem [resolvable:$true] %s26
      %32 = dma.hbm_to_vmem [thread:$0]  %s1, 4096, %s27, [#allocation6], 256, 256, 16
    $region9: #{tpu_custom_call.1} parent=1 // pred_fallthru
      _
    // Predicated region
    $region10: #{tpu_custom_call.1} parent=1 // pred_check
      _
    $region11: #{tpu_custom_call.1} parent=1 // pred_check_branch
      %34 = sbr.rel (0) target = $region13
    $region12: #{tpu_custom_call.1} parent=1 // pred_region
      _
    $region13: #{tpu_custom_call.1} parent=1 // pred_fallthru
      _
    // Predicated region
    $region14: #{tpu_custom_call.1} parent=1 // pred_check
      _
    $region15: #{tpu_custom_call.1} parent=1 // pred_check_branch
      %36 = sbr.rel (0) target = $region17
    $region16: #{tpu_custom_call.1} parent=1 // pred_region
      %37 = dma.done [#allocation3], 128
    $region17: #{tpu_custom_call.1} parent=1 // pred_fallthru
      _
    // Predicated region
    $region18: #{tpu_custom_call.1} parent=1 // pred_check
      _
    $region19: #{tpu_custom_call.1} parent=1 // pred_check_branch
      %39 = sbr.rel (0) target = $region21
    $region20: #{tpu_custom_call.1} parent=1 // pred_region
      %40 = dma.done [#allocation6], 4096
    $region21: #{tpu_custom_call.1} parent=1 // pred_fallthru
      _
    %v41 = vld [vmem:[#allocation2] sm:$0xff]
    %v42 = vld [vmem:[#allocation5] sm:$0xff]
    %v43 = vld [vmem:[#allocation5 + $0x8] sm:$0xff]
    %v44 = vld [vmem:[#allocation5 + $0x10] sm:$0xff]
    %v45 = vld [vmem:[#allocation5 + $0x18] sm:$0xff]
    %v46 = vld [vmem:[#allocation5 + $0x20] sm:$0xff]
    %v47 = vld [vmem:[#allocation5 + $0x28] sm:$0xff]
    %v48 = vld [vmem:[#allocation5 + $0x30] sm:$0xff]
    %v49 = vld [vmem:[#allocation5 + $0x38] sm:$0xff]
    %v50 = vld [vmem:[#allocation5 + $0x40] sm:$0xff]
    %v51 = vld [vmem:[#allocation5 + $0x48] sm:$0xff]
    %v52 = vld [vmem:[#allocation5 + $0x50] sm:$0xff]
    %v53 = vld [vmem:[#allocation5 + $0x58] sm:$0xff]
    %v54 = vld [vmem:[#allocation5 + $0x60] sm:$0xff]
    %v55 = vld [vmem:[#allocation5 + $0x68] sm:$0xff]
    %v56 = vld [vmem:[#allocation5 + $0x70] sm:$0xff]
    %v57 = vld [vmem:[#allocation5 + $0x78] sm:$0xff]
    %v58 = vld [vmem:[#allocation5 + $0x80] sm:$0xff]
    %v59 = vld [vmem:[#allocation5 + $0x88] sm:$0xff]
    %v60 = vld [vmem:[#allocation5 + $0x90] sm:$0xff]
    %v61 = vld [vmem:[#allocation5 + $0x98] sm:$0xff]
    %v62 = vld [vmem:[#allocation5 + $0xa0] sm:$0xff]
    %v63 = vld [vmem:[#allocation5 + $0xa8] sm:$0xff]
    %v64 = vld [vmem:[#allocation5 + $0xb0] sm:$0xff]
    %v65 = vld [vmem:[#allocation5 + $0xb8] sm:$0xff]
    %v66 = vld [vmem:[#allocation5 + $0xc0] sm:$0xff]
    %v67 = vld [vmem:[#allocation5 + $0xc8] sm:$0xff]
    %v68 = vld [vmem:[#allocation5 + $0xd0] sm:$0xff]
    %v69 = vld [vmem:[#allocation5 + $0xd8] sm:$0xff]
    %v70 = vld [vmem:[#allocation5 + $0xe0] sm:$0xff]
    %v71 = vld [vmem:[#allocation5 + $0xe8] sm:$0xff]
    %v72 = vld [vmem:[#allocation5 + $0xf0] sm:$0xff]
    %v73 = vld [vmem:[#allocation5 + $0xf8] sm:$0xff]
    %v74 = vld [vmem:[%s2] sm:$0x3]
    %v76 = vlaneseq
    %v77 = vshrl.u32 %v76, 7
    %v78 = vsub.s32 0, %v77
    %v79 = vrot.slane %v74, %v78
    %v80 = vlaneseq
    %v81 = vshrl.u32 %v80, 7
    %v82 = vsub.s32 1, %v81
    %v83 = vrot.slane %v74, %v82
    %86 = vmatprep.subr.mxu0 %v43
    %87 = vmatpush1.msra.mxu0 %v42
    %88 = vmatprep.subr.mxu0 %v45
    %89 = vmatpush1.msra.mxu0 %v44
    %90 = vmatprep.subr.mxu0 %v47
    %91 = vmatpush1.msra.mxu0 %v46
    %92 = vmatprep.subr.mxu0 %v49
    %93 = vmatpush1.msra.mxu0 %v48
    %94 = vmatprep.subr.mxu0 %v51
    %95 = vmatpush1.msra.mxu0 %v50
    %96 = vmatprep.subr.mxu0 %v53
    %97 = vmatpush1.msra.mxu0 %v52
    %98 = vmatprep.subr.mxu0 %v55
    %99 = vmatpush1.msra.mxu0 %v54
    %100 = vmatprep.subr.mxu0 %v57
    %101 = vmatpush1.msra.mxu0 %v56
    %102 = vmatprep.subr.mxu0 %v59
    %103 = vmatpush1.msra.mxu0 %v58
    %104 = vmatprep.subr.mxu0 %v61
    %105 = vmatpush1.msra.mxu0 %v60
    %106 = vmatprep.subr.mxu0 %v63
    %107 = vmatpush1.msra.mxu0 %v62
    %108 = vmatprep.subr.mxu0 %v65
    %109 = vmatpush1.msra.mxu0 %v64
    %110 = vmatprep.subr.mxu0 %v67
    %111 = vmatpush1.msra.mxu0 %v66
    %112 = vmatprep.subr.mxu0 %v69
    %113 = vmatpush1.msra.mxu0 %v68
    %114 = vmatprep.subr.mxu0 %v71
    %115 = vmatpush1.msra.mxu0 %v70
    %116 = vmatprep.subr.mxu0 %v73
    %117 = vmatpush1.msra.mxu0 %v72
    %118 = vmatprep.subr.mxu0 0.0
    %119 = vmatpush1.msra.mxu0 0.0
    %120 = vmatprep.subr.mxu0 0.0
    %121 = vmatpush1.msra.mxu0 0.0
    %122 = vmatprep.subr.mxu0 0.0
    %123 = vmatpush1.msra.mxu0 0.0
    %124 = vmatprep.subr.mxu0 0.0
    %125 = vmatpush1.msra.mxu0 0.0
    %126 = vmatprep.subr.mxu0 0.0
    %127 = vmatpush1.msra.mxu0 0.0
    %128 = vmatprep.subr.mxu0 0.0
    %129 = vmatpush1.msra.mxu0 0.0
    %130 = vmatprep.subr.mxu0 0.0
    %131 = vmatpush1.msra.mxu0 0.0
    %132 = vmatprep.subr.mxu0 0.0
    %133 = vmatpush1.msra.mxu0 0.0
    %134 = vmatprep.subr.mxu0 0.0
    %135 = vmatpush1.msra.mxu0 0.0
    %136 = vmatprep.subr.mxu0 0.0
    %137 = vmatpush1.msra.mxu0 0.0
    %138 = vmatprep.subr.mxu0 0.0
    %139 = vmatpush1.msra.mxu0 0.0
    %140 = vmatprep.subr.mxu0 0.0
    %141 = vmatpush1.msra.mxu0 0.0
    %142 = vmatprep.subr.mxu0 0.0
    %143 = vmatpush1.msra.mxu0 0.0
    %144 = vmatprep.subr.mxu0 0.0
    %145 = vmatpush1.msra.mxu0 0.0
    %146 = vmatprep.subr.mxu0 0.0
    %147 = vmatpush1.msra.mxu0 0.0
    %148 = vmatprep.subr.mxu0 0.0
    %149 = vmatpush1.msra.mxu0 0.0
    %150 = vmatprep.mubr.f32.mxu0 0.0
    %151 = vmatmul.mubr.f32.gmra.mrb[0].mxu0 %v41
    %v152 = vpop.f32.mrb[0].mxu0
    %v153 = vadd.f32 %v79, %v152
    %v154 = vpop.f32.mrb[0].mxu0
    %v155 = vadd.f32 %v83, %v154
    %156 = vdwg.mxu0
    %v157 = vxor.u32 %v153, 2147483648
    %v158 = vmul.f32 %v157, 1.442695
    %v159 = vpow.pop %v158
    %v160 = vadd.f32 %v159, 1.0
    %v161 = vrcp.pop %v160
    %v162 = vmul.f32 1.0, %v161
    %v163 = vmax.f32 %v155, 0.0
    %v164 = vsub.f32 %v163, %v41
    %v165 = vmul.f32 %v162, %v164
    %v166 = vadd.f32 %v165, %v41
    %167 = vst [vmem:[#allocation7] sm:$0xff] %v166
    // Predicated region
    $region22: #{tpu_custom_call.1} parent=1 // pred_check
      _
    $region23: #{tpu_custom_call.1} parent=1 // pred_check_branch
      %169 = sbr.rel (0) target = $region25
    $region24: #{tpu_custom_call.1} parent=1 // pred_region
      %s171 = ssub.s32 128, 128
      %172 = vsyncadd [#allocation4], %s171
      %s174 = sshll.u32 [#allocation7], 4
      %s175 = int_to_ptr.vmem [resolvable:$true] %s174
      %177 = dma.vmem_to_hbm [thread:$0]  %s175, 128, %s3, [#allocation4]
    $region25: #{tpu_custom_call.1} parent=1 // pred_fallthru
      _
    // Predicated region
    $region26: #{tpu_custom_call.1} parent=1 // pred_check
      _
    $region27: #{tpu_custom_call.1} parent=1 // pred_check_branch
      %179 = sbr.rel (0) target = $region29
    $region28: #{tpu_custom_call.1} parent=1 // pred_region
      %180 = dma.done [#allocation4], 128
    $region29: #{tpu_custom_call.1} parent=1 // pred_fallthru
      _
    %181 = vsyncpa [#allocation3], 1
    %182 = vsyncpa [#allocation6], 1
    %183 = vsyncpa [#allocation4], 1

</llo_original>
